<compile_context>
chip_gen: v7x
topology: tpu7x:2x2x1
jax: 0.10.0
libtpu: 0.0.40
codegen_flags: <defaults>
</compile_context>

<pallas_src>
import functools

import jax
import jax.numpy as jnp
from jax.experimental import pallas as pl
from jax.experimental.pallas import tpu as pltpu


def _contrastive_loss_kernel(scores_ref, dcol_ref, drow_ref, out_ref,
                             colmax_ref, acc_ref, *, margin, mode, tile_rows):
    i = pl.program_id(0)
    last = pl.num_programs(0) - 1

    @pl.when(i == 0)
    def _init():
        acc_ref[...] = jnp.zeros_like(acc_ref)
        colmax_ref[...] = jnp.zeros_like(colmax_ref)   # costs are >= 0, so 0 is a safe identity

    tm, n = scores_ref.shape
    s = scores_ref[...].astype(jnp.float32) + margin    # fold the margin add once
    d1 = dcol_ref[...].astype(jnp.float32)              # (TM, 1): scores[i, i] for this row tile
    d2 = drow_ref[...].astype(jnp.float32)              # (1, N) : scores[j, j] for every column

    cost_s = jnp.maximum(s - d1, 0.0)                   # (margin + scores - d1).clamp(min=0)
    cost_im = jnp.maximum(s - d2, 0.0)                  # (margin + scores - d2).clamp(min=0)

    if mode == 'Hardest_Negative':
        # masked_fill_(I, 0): zero only the diagonal entries present in this row tile.
        row = i * tile_rows + jax.lax.broadcasted_iota(jnp.int32, (tm, n), 0)
        col = jax.lax.broadcasted_iota(jnp.int32, (tm, n), 1)
        eye = row == col
        cost_s = jnp.where(eye, 0.0, cost_s)
        cost_im = jnp.where(eye, 0.0, cost_im)

        row_max = jnp.max(cost_s, axis=1, keepdims=True)            # (TM, 1)
        acc_ref[...] += jnp.sum(row_max, axis=0, keepdims=True)     # (1, 1) running sum
        colmax_ref[...] = jnp.maximum(colmax_ref[...],
                                      jnp.max(cost_im, axis=0, keepdims=True))
    else:
        # Plain-sum branch: skip the diagonal masks entirely.  Each diagonal
        # element contributes exactly relu(margin) to each cost; corrected below.
        tile_sum = (jnp.sum(jnp.sum(cost_s, axis=1, keepdims=True), axis=0, keepdims=True)
                    + jnp.sum(jnp.sum(cost_im, axis=1, keepdims=True), axis=0, keepdims=True))
        acc_ref[...] += tile_sum

    @pl.when(i == last)
    def _finalize():
        if mode == 'Hardest_Negative':
            out_ref[...] = acc_ref[...] + jnp.sum(colmax_ref[...], axis=1, keepdims=True)
        else:
            correction = 2.0 * float(n) * max(float(margin), 0.0)
            out_ref[...] = acc_ref[...] - correction


def _pick_tile_rows(n, elem_bytes):
    """Largest row tile that (a) divides N, (b) is a multiple of 8, and
    (c) keeps one (TM, N) input tile within ~8 MiB (so a double-buffered
    pipeline fits comfortably in scoped VMEM on v5e/v6e/v7x)."""
    if n % 8 != 0:
        return n                                  # single full-extent block
    budget_bytes = 8 * 1024 * 1024
    tm = budget_bytes // max(1, n * elem_bytes)
    tm = min(n, max(8, (tm // 8) * 8))
    while n % tm != 0:                            # exact tiling only (no partial blocks)
        tm -= 8
    return tm


def contrastive_loss(scores, *, margin=0.0, rank_loss='Hardest_Negative',
                     tile_rows=None):
    """Pallas-backed equivalent of ContrastiveLoss(opt, margin).forward(scores)."""
    if rank_loss == 'DynamicTopK_Negative':
        # TODO(synk): data-dependent top-K over a sorted cost matrix has no clean
        # Mosaic lowering (in-kernel sort); not implemented.
        raise NotImplementedError("DynamicTopK_Negative is not supported")

    n, n2 = scores.shape
    assert n == n2, "scores must be square (N, N)"

    # Precompute the diagonal once in the wrapper (cheap, O(N)).
    diag = jnp.diagonal(scores).astype(jnp.float32)
    dcol = diag.reshape(n, 1)
    drow = diag.reshape(1, n)

    tm = tile_rows if tile_rows is not None else _pick_tile_rows(n, scores.dtype.itemsize)
    assert n % tm == 0 and (tm % 8 == 0 or tm == n), (n, tm)
    grid = (n // tm,)

    kernel = functools.partial(_contrastive_loss_kernel,
                               margin=float(margin), mode=rank_loss, tile_rows=tm)

    out = pl.pallas_call(
        kernel,
        out_shape=jax.ShapeDtypeStruct((1, 1), jnp.float32),
        grid_spec=pltpu.PrefetchScalarGridSpec(
            num_scalar_prefetch=0,
            grid=grid,
            in_specs=[
                pl.BlockSpec((tm, n), lambda i: (i, 0)),   # streamed row tile of scores
                pl.BlockSpec((tm, 1), lambda i: (i, 0)),   # diag slice matching these rows
                pl.BlockSpec((1, n), lambda i: (0, 0)),    # full diag, resident across grid
            ],
            out_specs=pl.BlockSpec((1, 1), lambda i: (0, 0)),
            scratch_shapes=[
                pltpu.VMEM((1, n), jnp.float32),   # running column-max of cost_im
                pltpu.VMEM((1, 1), jnp.float32),   # running scalar accumulator
            ],
        ),
        compiler_params=pltpu.CompilerParams(
            dimension_semantics=("arbitrary",),            # grid axis carries accumulators
            vmem_limit_bytes=48 * 1024 * 1024,
        ),
    )(scores, dcol, drow)
    return out[0, 0]


def _reference_loss(scores, margin=0.0, rank_loss='Hardest_Negative'):
    """Pure-JAX reference mirroring the PyTorch semantics."""
    n = scores.shape[0]
    scores = scores.astype(jnp.float32)
    diag = jnp.diag(scores).reshape(n, 1)
    d1 = jnp.broadcast_to(diag, (n, n))
    d2 = jnp.broadcast_to(diag.T, (n, n))
    cost_s = jnp.maximum(margin + scores - d1, 0.0)
    cost_im = jnp.maximum(margin + scores - d2, 0.0)
    eye = jnp.eye(n, dtype=bool)
    cost_s = jnp.where(eye, 0.0, cost_s)
    cost_im = jnp.where(eye, 0.0, cost_im)
    if rank_loss == 'Hardest_Negative':
        return jnp.sum(jnp.max(cost_s, axis=1)) + jnp.sum(jnp.max(cost_im, axis=0))
    return jnp.sum(cost_s) + jnp.sum(cost_im)


if __name__ == "__main__":
    key = jax.random.PRNGKey(0)
    N = 128  # small batch of (image, caption) pairs -> (N, N) score matrix
    scores = jax.random.normal(key, (N, N), dtype=jnp.float32)
    margin = 0.2

    # Hardest_Negative branch — tile_rows=32 forces a 4-step grid so the
    # cross-tile accumulator / running column-max path is exercised.
    loss_hard = contrastive_loss(scores, margin=margin,
                                 rank_loss='Hardest_Negative', tile_rows=32)
    jax.block_until_ready(loss_hard)
    ref_hard = _reference_loss(scores, margin, 'Hardest_Negative')
    assert jnp.allclose(loss_hard, ref_hard, rtol=1e-4, atol=1e-3), (loss_hard, ref_hard)

    # Plain-sum branch (the `else` in the PyTorch forward).
    loss_sum = contrastive_loss(scores, margin=margin,
                                rank_loss='Sum_Negative', tile_rows=32)
    jax.block_until_ready(loss_sum)
    ref_sum = _reference_loss(scores, margin, 'Sum_Negative')
    assert jnp.allclose(loss_sum, ref_sum, rtol=1e-4, atol=1e-3), (loss_sum, ref_sum)

    # Auto-picked tile size (single block at this small N).
    loss_auto = contrastive_loss(scores, margin=margin, rank_loss='Hardest_Negative')
    jax.block_until_ready(loss_auto)
    assert jnp.allclose(loss_auto, ref_hard, rtol=1e-4, atol=1e-3), (loss_auto, ref_hard)

    print("KERNEL_OK")
</pallas_src>

<mosaic_0001>
module attributes {stable_mosaic.version = 11 : i64} {
  func.func @_contrastive_loss_kernel(%arg0: i32, %arg1: memref<32x128xf32, #tpu.memory_space<vmem>>, %arg2: memref<32x1xf32, #tpu.memory_space<vmem>>, %arg3: memref<1x128xf32, #tpu.memory_space<vmem>>, %arg4: memref<1x1xf32, #tpu.memory_space<vmem>>, %arg5: memref<1x128xf32, #tpu.memory_space<vmem>>, %arg6: memref<1x1xf32, #tpu.memory_space<vmem>>) attributes {dimension_semantics = [#tpu.dimension_semantics<arbitrary>], iteration_bounds = array<i64: 4>, scalar_prefetch = 0 : i64, scratch_operands = 2 : i64, tpu.core_type = #tpu.core_type<tc>, window_params = [{transform_indices = @transform_0, window_bounds = array<i64: 32, 128>}, {transform_indices = @transform_1, window_bounds = array<i64: 32, 1>}, {pipeline_mode = #tpu.pipeline_mode<synchronous>, transform_indices = @transform_2, window_bounds = array<i64: 1, 128>}, {pipeline_mode = #tpu.pipeline_mode<synchronous>, transform_indices = @transform_3, window_bounds = array<i64: 1, 1>}]} {
    %c0_i32 = arith.constant 0 : i32
    %0 = arith.cmpi eq, %arg0, %c0_i32 : i32
    %1 = arith.extui %0 : i1 to i32
    %c0_i32_0 = arith.constant 0 : i32
    %2 = arith.cmpi ne, %1, %c0_i32_0 : i32
    scf.if %2 {
      %cst_22 = arith.constant 0.000000e+00 : f32
      %41 = vector.broadcast %cst_22 : f32 to vector<1x1xf32>
      %c0_23 = arith.constant 0 : index
      %c0_24 = arith.constant 0 : index
      %42 = vector.load %arg6[%c0_23, %c0_24] : memref<1x1xf32, #tpu.memory_space<vmem>>, vector<1x1xf32>
      tpu.vector_store %arg6[%c0_23, %c0_24], %41 {strides = array<i32>} : memref<1x1xf32, #tpu.memory_space<vmem>>, vector<1x1xf32>,
      %cst_25 = arith.constant 0.000000e+00 : f32
      %43 = vector.broadcast %cst_25 : f32 to vector<1x128xf32>
      %c0_26 = arith.constant 0 : index
      %c0_27 = arith.constant 0 : index
      %44 = vector.load %arg5[%c0_26, %c0_27] : memref<1x128xf32, #tpu.memory_space<vmem>>, vector<1x128xf32>
      tpu.vector_store %arg5[%c0_26, %c0_27], %43 {strides = array<i32>} : memref<1x128xf32, #tpu.memory_space<vmem>>, vector<1x128xf32>,
    } else {
    }
    %c0 = arith.constant 0 : index
    %c0_1 = arith.constant 0 : index
    %3 = vector.load %arg1[%c0, %c0_1] : memref<32x128xf32, #tpu.memory_space<vmem>>, vector<32x128xf32>
    %cst = arith.constant 2.000000e-01 : f32
    %4 = vector.broadcast %cst : f32 to vector<32x128xf32>
    %5 = arith.addf %3, %4 : vector<32x128xf32>
    %c0_2 = arith.constant 0 : index
    %c0_3 = arith.constant 0 : index
    %6 = vector.load %arg2[%c0_2, %c0_3] : memref<32x1xf32, #tpu.memory_space<vmem>>, vector<32x1xf32>
    %c0_4 = arith.constant 0 : index
    %c0_5 = arith.constant 0 : index
    %7 = vector.load %arg3[%c0_4, %c0_5] : memref<1x128xf32, #tpu.memory_space<vmem>>, vector<1x128xf32>
    %8 = vector.broadcast %6 : vector<32x1xf32> to vector<32x128xf32>
    %9 = arith.subf %5, %8 : vector<32x128xf32>
    %cst_6 = arith.constant 0.000000e+00 : f32
    %10 = vector.broadcast %cst_6 : f32 to vector<32x128xf32>
    %11 = arith.maximumf %9, %10 : vector<32x128xf32>
    %12 = vector.broadcast %7 : vector<1x128xf32> to vector<32x128xf32>
    %13 = arith.subf %5, %12 : vector<32x128xf32>
    %cst_7 = arith.constant 0.000000e+00 : f32
    %14 = vector.broadcast %cst_7 : f32 to vector<32x128xf32>
    %15 = arith.maximumf %13, %14 : vector<32x128xf32>
    %c32_i32 = arith.constant 32 : i32
    %16 = arith.muli %arg0, %c32_i32 : i32
    %17 = tpu.iota {dimensions = array<i32: 0>} : vector<32x128xi32>
    %18 = vector.broadcast %16 : i32 to vector<32x128xi32>
    %19 = arith.addi %18, %17 : vector<32x128xi32>
    %20 = tpu.iota {dimensions = array<i32: 1>} : vector<32x128xi32>
    %21 = arith.cmpi eq, %19, %20 : vector<32x128xi32>
    %cst_8 = arith.constant 0.000000e+00 : f32
    %22 = vector.broadcast %cst_8 : f32 to vector<32x128xf32>
    %23 = arith.select %21, %22, %11 : vector<32x128xi1>, vector<32x128xf32>
    %cst_9 = arith.constant 0.000000e+00 : f32
    %24 = vector.broadcast %cst_9 : f32 to vector<32x128xf32>
    %25 = arith.select %21, %24, %15 : vector<32x128xi1>, vector<32x128xf32>
    %cst_10 = arith.constant dense<0xFF800000> : vector<32xf32>
    %26 = vector.multi_reduction <maximumf>, %23, %cst_10 [1] : vector<32x128xf32> to vector<32xf32>
    %27 = vector.shape_cast %26 : vector<32xf32> to vector<32x1xf32>
    %c0_11 = arith.constant 0 : index
    %c0_12 = arith.constant 0 : index
    %28 = vector.load %arg6[%c0_11, %c0_12] : memref<1x1xf32, #tpu.memory_space<vmem>>, vector<1x1xf32>
    %cst_13 = arith.constant dense<0.000000e+00> : vector<1xf32>
    %29 = vector.multi_reduction <add>, %27, %cst_13 [0] : vector<32x1xf32> to vector<1xf32>
    %30 = vector.shape_cast %29 : vector<1xf32> to vector<1x1xf32>
    %31 = arith.addf %28, %30 : vector<1x1xf32>
    %c0_14 = arith.constant 0 : index
    %c0_15 = arith.constant 0 : index
    %32 = vector.load %arg6[%c0_14, %c0_15] : memref<1x1xf32, #tpu.memory_space<vmem>>, vector<1x1xf32>
    tpu.vector_store %arg6[%c0_14, %c0_15], %31 {strides = array<i32>} : memref<1x1xf32, #tpu.memory_space<vmem>>, vector<1x1xf32>,
    %c0_16 = arith.constant 0 : index
    %c0_17 = arith.constant 0 : index
    %33 = vector.load %arg5[%c0_16, %c0_17] : memref<1x128xf32, #tpu.memory_space<vmem>>, vector<1x128xf32>
    %cst_18 = arith.constant dense<0xFF800000> : vector<128xf32>
    %34 = vector.multi_reduction <maximumf>, %25, %cst_18 [0] : vector<32x128xf32> to vector<128xf32>
    %35 = vector.shape_cast %34 : vector<128xf32> to vector<1x128xf32>
    %36 = arith.maximumf %33, %35 : vector<1x128xf32>
    %c0_19 = arith.constant 0 : index
    %c0_20 = arith.constant 0 : index
    %37 = vector.load %arg5[%c0_19, %c0_20] : memref<1x128xf32, #tpu.memory_space<vmem>>, vector<1x128xf32>
    tpu.vector_store %arg5[%c0_19, %c0_20], %36 {strides = array<i32>} : memref<1x128xf32, #tpu.memory_space<vmem>>, vector<1x128xf32>,
    %c3_i32 = arith.constant 3 : i32
    %38 = arith.cmpi eq, %arg0, %c3_i32 : i32
    %39 = arith.extui %38 : i1 to i32
    %c0_i32_21 = arith.constant 0 : i32
    %40 = arith.cmpi ne, %39, %c0_i32_21 : i32
    scf.if %40 {
      %c0_22 = arith.constant 0 : index
      %c0_23 = arith.constant 0 : index
      %41 = vector.load %arg6[%c0_22, %c0_23] : memref<1x1xf32, #tpu.memory_space<vmem>>, vector<1x1xf32>
      %c0_24 = arith.constant 0 : index
      %c0_25 = arith.constant 0 : index
      %42 = vector.load %arg5[%c0_24, %c0_25] : memref<1x128xf32, #tpu.memory_space<vmem>>, vector<1x128xf32>
      %cst_26 = arith.constant dense<0.000000e+00> : vector<1xf32>
      %43 = vector.multi_reduction <add>, %42, %cst_26 [1] : vector<1x128xf32> to vector<1xf32>
      %44 = vector.shape_cast %43 : vector<1xf32> to vector<1x1xf32>
      %45 = arith.addf %41, %44 : vector<1x1xf32>
      %c0_27 = arith.constant 0 : index
      %c0_28 = arith.constant 0 : index
      %46 = vector.load %arg4[%c0_27, %c0_28] : memref<1x1xf32, #tpu.memory_space<vmem>>, vector<1x1xf32>
      tpu.vector_store %arg4[%c0_27, %c0_28], %45 {strides = array<i32>} : memref<1x1xf32, #tpu.memory_space<vmem>>, vector<1x1xf32>,
    } else {
    }
    return
  }
  func.func @transform_0(%arg0: i32) -> (i32, i32) {
    %c0_i32 = arith.constant 0 : i32
    %c0_i32_0 = arith.constant 0 : i32
    return %arg0, %c0_i32 : i32, i32
  }
  func.func @transform_1(%arg0: i32) -> (i32, i32) {
    %c0_i32 = arith.constant 0 : i32
    %c0_i32_0 = arith.constant 0 : i32
    return %arg0, %c0_i32 : i32, i32
  }
  func.func @transform_2(%arg0: i32) -> (i32, i32) {
    %c0_i32 = arith.constant 0 : i32
    %c0_i32_0 = arith.constant 0 : i32
    %c0_i32_1 = arith.constant 0 : i32
    return %c0_i32, %c0_i32_0 : i32, i32
  }
  func.func @transform_3(%arg0: i32) -> (i32, i32) {
    %c0_i32 = arith.constant 0 : i32
    %c0_i32_0 = arith.constant 0 : i32
    %c0_i32_1 = arith.constant 0 : i32
    return %c0_i32, %c0_i32_0 : i32, i32
  }
}

</mosaic_0001>

<llo_original>
// kernel: tpu_custom_call.1
$region0: #{tpu_custom_call.1}
  #allocation0 [shape = 'u32[]', space=smem, size = 0x4, offset = 0x4, fixed_abs, tag = 'smem constant byte address 0x4 - core index']
  #allocation1 [shape = 'u32[144,128]{1,0:T(1,128)}', space=vmem, size = 0x12000, scoped, tag = 'internal scratch']
  #allocation2 [shape = 'f32[1,128]{1,0:T(1,128)}', space=vmem, size = 0x200, scoped, tag = 'scratch operand']
  #allocation3 [shape = 'f32[1,1]{1,0:T(1,128)}', space=vmem, size = 0x200, scoped, tag = 'scratch operand']
  %s0 = inlined_call_operand.vmem [shape: f32[128,128], index: 0, kind: input, shape index: {}]
  %s1 = inlined_call_operand.vmem [shape: f32[128,1], index: 1, kind: input, shape index: {}]
  %s2 = inlined_call_operand.vmem [shape: f32[1,128], index: 2, kind: input, shape index: {}]
  %s3 = inlined_call_operand.hbm [shape: f32[1,1], index: 3, kind: output, shape index: {}]
  %s4 = sld [smem:[#allocation0]]
  $region53: #{tpu_custom_call.1} parent=0
    _
  %s6 = ssub.s32 1, %s4
  %s7 = scalar_select 0, %s6, %s4
  $region1: #{tpu_custom_call.1} parent=0
    #allocation4 [shape = 'u8[512]{0}', space=vmem, size = 0x400, scoped, tag = 'output window, operand 0, single buffered']
    #allocation5 [shape = 's32[2]{0}', space=sflag, size = 0x8, scoped, tag = 'scoped memory for tpu_custom_call.1']
    %8 = vsyncpa [#allocation5], 0
    loop: start=0, step=1, limit=6
    $region2: #{tpu_custom_call.1} parent=1 // loop_pre_header
      _
    $region3: #{tpu_custom_call.1} parent=1 // loop_header
      %s10 = sphi 0, %s14
      %p11 = scmp.ge.s32.totalorder %s10, 6
      %s20 = sphi 0, %s22
      %s23 = sphi 0, %s20
      %s24 = sphi 0, %s23
      %s40 = sphi 0, %s24
      %s46 = sphi 0, %s48
      %s49 = sphi 0, %s46
      %s50 = sphi 0, %s49
      %s66 = sphi 0, %s50
      %s70 = sphi 0, %s70
      %s72 = sphi 0, %s70
      %s73 = sphi 0, %s72
      %s87 = sphi 0, %s73
      %s91 = sphi 0, %s91
      %s93 = sphi 0, %s91
      %s94 = sphi 0, %s93
      %s108 = sphi 0, %s94
    $region4: #{tpu_custom_call.1} parent=1 // loop_header_branch
      %13 = sbr.rel (%p11) target = $region8
    $region5: #{tpu_custom_call.1} parent=1 // loop_body
      %s15 = ssub.s32 %s10, 1
      %s16 = ssub.s32 %s10, 2
      %s17 = sadd.s32 %s10, 1
      %s18 = ssub.s32 %s10, %s17
      %p19 = scmp.eq.s32.totalorder %s18, 0
      %s21 = sadd.s32 %s20, 1
      %s22 = scalar_select %p19, %s20, %s21
      %p25 = pneg %p19
      %p26 = scmp.eq.s32.totalorder %s10, 3
      %p27 = por %p25, %p26
      %p28 = scmp.ne.s32.totalorder %s20, %s23
      %p29 = scmp.eq.s32.totalorder %s10, 0
      %p30 = por %p28, %p29
      %p31 = scmp.ne.s32.totalorder %s20, %s23
      %p32 = scmp.eq.s32.totalorder %s15, 3
      %p33 = por %p31, %p32
      %p34 = scmp.ne.s32.totalorder %s23, %s24
      %p35 = scmp.eq.s32.totalorder %s15, 0
      %p36 = por %p34, %p35
      %p37 = scmp.ne.s32.totalorder %s23, %s24
      %p38 = scmp.eq.s32.totalorder %s16, 3
      %p39 = por %p37, %p38
      %p41 = scmp.ne.s32.totalorder %s24, %s40
      %p42 = scmp.eq.s32.totalorder %s16, 0
      %p43 = por %p41, %p42
      %s44 = ssub.s32 %s10, %s17
      %p45 = scmp.eq.s32.totalorder %s44, 0
      %s47 = sadd.s32 %s46, 1
      %s48 = scalar_select %p45, %s46, %s47
      %p51 = pneg %p45
      %p52 = scmp.eq.s32.totalorder %s10, 3
      %p53 = por %p51, %p52
      %p54 = scmp.ne.s32.totalorder %s46, %s49
      %p55 = scmp.eq.s32.totalorder %s10, 0
      %p56 = por %p54, %p55
      %p57 = scmp.ne.s32.totalorder %s46, %s49
      %p58 = scmp.eq.s32.totalorder %s15, 3
      %p59 = por %p57, %p58
      %p60 = scmp.ne.s32.totalorder %s49, %s50
      %p61 = scmp.eq.s32.totalorder %s15, 0
      %p62 = por %p60, %p61
      %p63 = scmp.ne.s32.totalorder %s49, %s50
      %p64 = scmp.eq.s32.totalorder %s16, 3
      %p65 = por %p63, %p64
      %p67 = scmp.ne.s32.totalorder %s50, %s66
      %p68 = scmp.eq.s32.totalorder %s16, 0
      %p69 = por %p67, %p68
      %s71 = sadd.s32 %s70, 1
      %p74 = scmp.eq.s32.totalorder %s10, 3
      %p75 = scmp.ne.s32.totalorder %s70, %s72
      %p76 = scmp.eq.s32.totalorder %s10, 0
      %p77 = por %p75, %p76
      %p78 = scmp.ne.s32.totalorder %s70, %s72
      %p79 = scmp.eq.s32.totalorder %s15, 3
      %p80 = por %p78, %p79
      %p81 = scmp.ne.s32.totalorder %s72, %s73
      %p82 = scmp.eq.s32.totalorder %s15, 0
      %p83 = por %p81, %p82
      %p84 = scmp.ne.s32.totalorder %s72, %s73
      %p85 = scmp.eq.s32.totalorder %s16, 3
      %p86 = por %p84, %p85
      %p88 = scmp.ne.s32.totalorder %s73, %s87
      %p89 = scmp.eq.s32.totalorder %s16, 0
      %p90 = por %p88, %p89
      %s92 = sadd.s32 %s91, 1
      %p95 = scmp.eq.s32.totalorder %s10, 3
      %p96 = scmp.ne.s32.totalorder %s91, %s93
      %p97 = scmp.eq.s32.totalorder %s10, 0
      %p98 = por %p96, %p97
      %p99 = scmp.ne.s32.totalorder %s91, %s93
      %p100 = scmp.eq.s32.totalorder %s15, 3
      %p101 = por %p99, %p100
      %p102 = scmp.ne.s32.totalorder %s93, %s94
      %p103 = scmp.eq.s32.totalorder %s15, 0
      %p104 = por %p102, %p103
      %p105 = scmp.ne.s32.totalorder %s93, %s94
      %p106 = scmp.eq.s32.totalorder %s16, 3
      %p107 = por %p105, %p106
      %p109 = scmp.ne.s32.totalorder %s94, %s108
      %p110 = scmp.eq.s32.totalorder %s16, 0
      %p111 = por %p109, %p110
      %p112 = scmp.le.s32.totalorder 1, %s10
      %p113 = scmp.lt.s32.totalorder %s10, 5
      %p114 = pnand %p112, %p113
      %p115 = pneg %p114
      // Predicated region
      $region9: #{tpu_custom_call.1} parent=5 // pred_check
        _
      $region10: #{tpu_custom_call.1} parent=5 // pred_check_branch
        %117 = sbr.rel (%p114) target = $region12
      $region11: #{tpu_custom_call.1} parent=5 // pred_region
        %s118 = ssub.s32 %s10, 1
        // Predicated region
        $region13: #{tpu_custom_call.1} parent=11 // pred_check
          %p119 = pneg %p83
        $region14: #{tpu_custom_call.1} parent=11 // pred_check_branch
          %121 = sbr.rel (%p119) target = $region16
        $region15: #{tpu_custom_call.1} parent=11 // pred_region
          _
        $region16: #{tpu_custom_call.1} parent=11 // pred_fallthru
          _
      $region12: #{tpu_custom_call.1} parent=5 // pred_fallthru
        _
      %p122 = scmp.lt.s32.totalorder %s10, 4
      // Predicated region
      $region17: #{tpu_custom_call.1} parent=5 // pred_check
        %p123 = pneg %p122
      $region18: #{tpu_custom_call.1} parent=5 // pred_check_branch
        %125 = sbr.rel (%p123) target = $region20
      $region19: #{tpu_custom_call.1} parent=5 // pred_region
        // Predicated region
        $region21: #{tpu_custom_call.1} parent=19 // pred_check
          %p126 = pneg %p30
        $region22: #{tpu_custom_call.1} parent=19 // pred_check_branch
          %128 = sbr.rel (%p126) target = $region24
        $region23: #{tpu_custom_call.1} parent=19 // pred_region
          %s129 = smul.u32 4, %s10
          %p130 = scmp.lt.s32.totalorder %s129, 15
          %s131 = scalar_select %p130, %s129, 15
          %s132 = smul.addr %s131, 8
          %s133 = scalar_lea.vmem %s0, %s132
          %s134 = smul.u32 4, %s10
        $region24: #{tpu_custom_call.1} parent=19 // pred_fallthru
          _
        // Predicated region
        $region25: #{tpu_custom_call.1} parent=19 // pred_check
          %p135 = pneg %p56
        $region26: #{tpu_custom_call.1} parent=19 // pred_check_branch
          %137 = sbr.rel (%p135) target = $region28
        $region27: #{tpu_custom_call.1} parent=19 // pred_region
          %s138 = smul.u32 4, %s10
          %p139 = scmp.lt.s32.totalorder %s138, 15
          %s140 = scalar_select %p139, %s138, 15
          %s141 = smul.addr %s140, 8
          %s142 = scalar_lea.vmem %s1, %s141
          %s143 = smul.u32 4, %s10
        $region28: #{tpu_custom_call.1} parent=19 // pred_fallthru
          _
      $region20: #{tpu_custom_call.1} parent=5 // pred_fallthru
        _
      %p144 = scmp.le.s32.totalorder 1, %s10
      %p145 = scmp.lt.s32.totalorder %s10, 5
      %p146 = pnand %p144, %p145
      %p147 = pneg %p146
      // Predicated region
      $region29: #{tpu_custom_call.1} parent=5 // pred_check
        _
      $region30: #{tpu_custom_call.1} parent=5 // pred_check_branch
        %149 = sbr.rel (%p146) target = $region32
      $region31: #{tpu_custom_call.1} parent=5 // pred_region
        %s150 = ssub.s32 %s10, 1
        %s151 = smul.u32 4, %s15
        %p152 = scmp.lt.s32.totalorder %s151, 15
        %s153 = scalar_select %p152, %s151, 15
        %s154 = smul.addr %s153, 8
        %s155 = scalar_lea.vmem %s0, %s154
        %p156 = pneg %p36
        %p157 = pneg %p33
        %s158 = smul.u32 4, %s15
        %p159 = scmp.lt.s32.totalorder %s158, 15
        %s160 = scalar_select %p159, %s158, 15
        %s161 = smul.addr %s160, 8
        %s162 = scalar_lea.vmem %s1, %s161
        %p163 = pneg %p62
        %p164 = pneg %p59
        %p165 = pneg %p83
        %p166 = pneg %p80
        %p167 = pneg %p104
        %p168 = pneg %p101
        %s169 = smul.u32 4, %s15
        %p170 = scmp.lt.s32.totalorder %s169, 15
        %s171 = scalar_select %p170, %s169, 15
        %s172 = smul.addr %s171, 8
        %s173 = scalar_lea.vmem %s0, %s172
        %s174 = smul.u32 4, %s15
        %s175 = smul.u32 4, %s15
        %p176 = scmp.lt.s32.totalorder %s175, 15
        %s177 = scalar_select %p176, %s175, 15
        %s178 = smul.addr %s177, 8
        %s179 = scalar_lea.vmem %s1, %s178
        %s180 = smul.u32 4, %s15
        %p181 = scmp.eq.s32.totalorder %s15, 0
        // Predicated region
        $region33: #{tpu_custom_call.1} parent=31 // pred_check
          %p182 = pneg %p181
        $region34: #{tpu_custom_call.1} parent=31 // pred_check_branch
          %184 = sbr.rel (%p182) target = $region36
        $region35: #{tpu_custom_call.1} parent=31 // pred_region
          %vm185 = vcmask 0
          %186 = vst.msk [vmem:[#allocation3] sm:$0x1] %vm185, 0.0
          %187 = vst [vmem:[#allocation2] sm:$0x1] 0.0
        $region36: #{tpu_custom_call.1} parent=31 // pred_fallthru
          _
        %v188 = vld [vmem:[%s173] sm:$0xff]
        %v189 = vld [vmem:[%s173 + $0x8] sm:$0xff]
        %v190 = vld [vmem:[%s173 + $0x10] sm:$0xff]
        %v191 = vld [vmem:[%s173 + $0x18] sm:$0xff]
        %v192 = vadd.f32 %v188, 0.2
        %v193 = vadd.f32 %v189, 0.2
        %v194 = vadd.f32 %v190, 0.2
        %v195 = vadd.f32 %v191, 0.2
        %v196 = vld [vmem:[%s179] sm:$0xff]
        %v197 = vld [vmem:[%s179 + $0x8] sm:$0xff]
        %v198 = vld [vmem:[%s179 + $0x10] sm:$0xff]
        %v199 = vld [vmem:[%s179 + $0x18] sm:$0xff]
        %v200 = vld [vmem:[%s2] sm:$0x1]
        %202 = vset.pattern.permute.xlu0 0
        %203 = vperm.xlu0 %202, %v196
        %v204 = vpop.permute.xlu0 %203
        %207 = vset.pattern.permute.xlu0 0
        %208 = vperm.xlu0 %207, %v197
        %v209 = vpop.permute.xlu0 %208
        %212 = vset.pattern.permute.xlu0 0
        %213 = vperm.xlu0 %212, %v198
        %v214 = vpop.permute.xlu0 %213
        %217 = vset.pattern.permute.xlu0 0
        %218 = vperm.xlu0 %217, %v199
        %v219 = vpop.permute.xlu0 %218
        %v221 = vsub.f32 %v192, %v204
        %v222 = vsub.f32 %v193, %v209
        %v223 = vsub.f32 %v194, %v214
        %v224 = vsub.f32 %v195, %v219
        %v225 = vmax.f32 %v221, 0.0
        %v226 = vmax.f32 %v222, 0.0
        %v227 = vmax.f32 %v223, 0.0
        %v228 = vmax.f32 %v224, 0.0
        %v230 = vlaneseq
        %v231 = vshrl.u32 %v230, 7
        %v232 = vsub.s32 0, %v231
        %v233 = vrot.slane %v200, %v232
        %v235 = vsub.f32 %v192, %v233
        %v236 = vsub.f32 %v193, %v233
        %v237 = vsub.f32 %v194, %v233
        %v238 = vsub.f32 %v195, %v233
        %v239 = vmax.f32 %v235, 0.0
        %v240 = vmax.f32 %v236, 0.0
        %v241 = vmax.f32 %v237, 0.0
        %v242 = vmax.f32 %v238, 0.0
        %s243 = smul.u32 %s15, 32
        %v244 = vlaneseq
        %v245 = vshrl.u32 %v244, 7
        %v246 = vadd.s32 %v245, 8
        %v247 = vadd.s32 %v245, 16
        %v248 = vadd.s32 %v245, 24
        %v249 = vstv %s243
        %v250 = vadd.s32 %v249, %v245
        %v251 = vadd.s32 %v249, %v246
        %v252 = vadd.s32 %v249, %v247
        %v253 = vadd.s32 %v249, %v248
        %v254 = vlaneseq
        %v255 = vand.u32 %v254, 127
        %vm256 = vcmp.eq.s32.totalorder %v250, %v255
        %vm257 = vcmp.eq.s32.totalorder %v251, %v255
        %vm258 = vcmp.eq.s32.totalorder %v252, %v255
        %vm259 = vcmp.eq.s32.totalorder %v253, %v255
        %v260 = vsel %vm256, 0.0, %v225
        %v261 = vsel %vm257, 0.0, %v226
        %v262 = vsel %vm258, 0.0, %v227
        %v263 = vsel %vm259, 0.0, %v228
        %v264 = vsel %vm256, 0.0, %v239
        %v265 = vsel %vm257, 0.0, %v240
        %v266 = vsel %vm258, 0.0, %v241
        %v267 = vsel %vm259, 0.0, %v242
        %268 = vmax.xlane.f32.xlu0 %v260
        %v269 = vpop.xlane.xlu0 %268
        %270 = vmax.xlane.f32.xlu0 %v261
        %v271 = vpop.xlane.xlu0 %270
        %272 = vmax.xlane.f32.xlu0 %v262
        %v273 = vpop.xlane.xlu0 %272
        %274 = vmax.xlane.f32.xlu0 %v263
        %v275 = vpop.xlane.xlu0 %274
        %v276 = vld [vmem:[#allocation3] sm:$0x1]
        %v277 = vadd.f32 %v269, %v271
        %v278 = vadd.f32 %v277, %v273
        %v279 = vadd.f32 %v278, %v275
        %v280 = vrot.slane %v279, 4
        %v281 = vadd.f32 %v279, %v280
        %v282 = vrot.slane %v281, 2
        %v283 = vadd.f32 %v281, %v282
        %v284 = vrot.slane %v283, 1
        %v285 = vadd.f32 %v283, %v284
        %v286 = vadd.f32 %v276, %v285
        %vm287 = vcmask 0
        %288 = vst.msk [vmem:[#allocation3] sm:$0x1] %vm287, %v286
        %v289 = vld [vmem:[#allocation2] sm:$0x1]
        %v290 = vmax.f32 %v264, %v265
        %v291 = vmax.f32 %v266, %v267
        %v292 = vmax.f32 %v290, %v291
        %v293 = vrot.slane %v292, 4
        %v294 = vmax.f32 %v292, %v293
        %v295 = vrot.slane %v294, 2
        %v296 = vmax.f32 %v294, %v295
        %v297 = vrot.slane %v296, 1
        %v298 = vmax.f32 %v296, %v297
        %v299 = vmax.f32 %v289, %v298
        %300 = vst [vmem:[#allocation2] sm:$0x1] %v299
        %p301 = scmp.eq.s32.totalorder %s15, 3
        // Predicated region
        $region37: #{tpu_custom_call.1} parent=31 // pred_check
          %p302 = pneg %p301
        $region38: #{tpu_custom_call.1} parent=31 // pred_check_branch
          %304 = sbr.rel (%p302) target = $region40
        $region39: #{tpu_custom_call.1} parent=31 // pred_region
          %v305 = vld [vmem:[#allocation3] sm:$0x1]
          %v306 = vld [vmem:[#allocation2] sm:$0x1]
          %vm307 = vcmask 1040384
          %v308 = vsel %vm307, %v306, 0.0
          %309 = vadd.xlane.f32.xlu0 %v308
          %v310 = vpop.xlane.xlu0 %309
          %v311 = vadd.f32 %v305, %v310
          %312 = vst.msk [vmem:[#allocation4] sm:$0x1] %vm287, %v311
        $region40: #{tpu_custom_call.1} parent=31 // pred_fallthru
          _
        // Predicated region
        $region41: #{tpu_custom_call.1} parent=31 // pred_check
          %p313 = pneg %p101
        $region42: #{tpu_custom_call.1} parent=31 // pred_check_branch
          %315 = sbr.rel (%p313) target = $region44
        $region43: #{tpu_custom_call.1} parent=31 // pred_region
          %s317 = ssub.s32 16, 16
          %318 = vsyncadd [#allocation5], %s317
          %s320 = sshll.u32 [#allocation4], 4
          %s321 = int_to_ptr.vmem [resolvable:$true] %s320
          %323 = dma.vmem_to_hbm [thread:$0]  %s321, 16, %s3, [#allocation5]
        $region44: #{tpu_custom_call.1} parent=31 // pred_fallthru
          _
        // Predicated region
        $region45: #{tpu_custom_call.1} parent=31 // pred_check
          %p324 = pneg %p101
        $region46: #{tpu_custom_call.1} parent=31 // pred_check_branch
          %326 = sbr.rel (%p324) target = $region48
        $region47: #{tpu_custom_call.1} parent=31 // pred_region
          %327 = dma.done [#allocation5], 16
        $region48: #{tpu_custom_call.1} parent=31 // pred_fallthru
          _
      $region32: #{tpu_custom_call.1} parent=5 // pred_fallthru
        _
      %p328 = scmp.le.s32.totalorder 2, %s10
      // Predicated region
      $region49: #{tpu_custom_call.1} parent=5 // pred_check
        %p329 = pneg %p328
      $region50: #{tpu_custom_call.1} parent=5 // pred_check_branch
        %331 = sbr.rel (%p329) target = $region52
      $region51: #{tpu_custom_call.1} parent=5 // pred_region
        %s332 = ssub.s32 %s10, 2
      $region52: #{tpu_custom_call.1} parent=5 // pred_fallthru
        _
    $region6: #{tpu_custom_call.1} parent=1 // loop_footer
      %s14 = sadd.s32 1, %s10
    $region7: #{tpu_custom_call.1} parent=1 // loop_footer_branch
      %9 = sbr.rel target = $region3
    $region8: #{tpu_custom_call.1} parent=1 // loop_exit
      _
    %333 = vsyncpa [#allocation5], 1
    %s334 = scalar_lea.sflag [#allocation5], 1
    %335 = vsyncpa %s334, 1

</llo_original>
